<compile_context>
chip_gen: v6e
topology: v6e:2x2x1
jax: 0.10.0
libtpu: 0.0.40
codegen_flags: <defaults>
</compile_context>

<pallas_src>
import jax
import jax.numpy as jnp
from jax.experimental import pallas as pl
from jax.experimental.pallas import tpu as pltpu


def _round_up(x, m):
    return (x + m - 1) // m * m


def _cdiv(a, b):
    return (a + b - 1) // b


# ---------------------------------------------------------------------------
# Parameter setup (module __init__): gamma unit hydrograph.  Plain JAX glue.
# ---------------------------------------------------------------------------
def uh_gamma(a, theta, len_uh=10):
    """Two-parameter gamma unit hydrograph, dims [K, batch, 1]."""
    assert len_uh <= a.shape[0]
    aa = jax.nn.relu(a[:len_uh]) + 0.1
    th = jax.nn.relu(theta[:len_uh]) + 0.5
    t = jnp.arange(0.5, len_uh * 1.0, dtype=jnp.float32).reshape(len_uh, 1, 1)
    # log-space evaluation of t^(a-1) * exp(-t/th) / (Gamma(a) * th^a)
    # (f32-stable, mathematically identical to the PyTorch reference).
    logw = (aa - 1.0) * jnp.log(t) - t / th - jax.lax.lgamma(aa) - aa * jnp.log(th)
    w = jnp.exp(logw)
    return w / w.sum(0)


# ---------------------------------------------------------------------------
# Pallas kernel: causal per-batch conv along time, lane-dense tiled layout.
# ---------------------------------------------------------------------------
def kernel_conv_forward(x, uh, *, tile_seq=512, tile_lane=2048,
                        megacore_lane_split=True):
    """x: [seq, batch, feat], uh: [K, batch, 1] f32 -> [seq, batch, feat]."""
    seq, B, F = x.shape
    K = uh.shape[0]
    L = B * F
    out_dtype = x.dtype

    # lane-dense layout: collapse (batch, feature) -> L.  Contiguous reshapes are free.
    x2 = x.reshape(seq, L)
    w2 = jnp.broadcast_to(uh.astype(jnp.float32).reshape(K, B, 1), (K, B, F)).reshape(K, L)

    # ---- lane tile -------------------------------------------------------
    tl = min(_round_up(max(tile_lane, 128), 128), _round_up(L, 128))
    if megacore_lane_split and L >= 256 and _cdiv(L, tl) < 2:
        # ensure >= 2 lane tiles so the "parallel" axis spans both v7x TensorCores
        tl = _round_up(_cdiv(L, 2), 128)
    if tl >= L:
        tl = L                      # single full-width lane block (full-dim exemption)

    # ---- seq tile --------------------------------------------------------
    ts = _round_up(max(tile_seq, 8), 8)
    ts = max(ts, _round_up(K, 8))   # the K-1 row halo must fit inside one tile
    if ts >= seq:
        ts = seq                    # single full-length seq block (full-dim exemption)

    KH = K - 1                      # time-halo length
    HP = _round_up(KH, 8) if KH else 0   # sublane-aligned halo rows in scratch

    # sub-block rows for in-register accumulation (keep acc <= ~16 vregs)
    SB = 8
    for cand in (32, 16):
        if ts % cand == 0 and cand * tl * 4 <= (64 << 10):
            SB = cand
            break
    SB = min(SB, ts)

    n_lane = _cdiv(L, tl)
    n_seq = _cdiv(seq, ts)
    grid = (n_lane, n_seq)

    def conv_kernel(w_ref, x_ref, o_ref, *scratch):
        # w_ref: [K, tl]  per-lane tap weights
        # x_ref: [ts, tl] current (seq, lane) tile
        # o_ref: [ts, tl] output tile
        if KH == 0:  # pointwise scaling, no halo needed
            w0 = w_ref[pl.ds(0, 1), :].astype(jnp.float32)
            o_ref[...] = (w0 * x_ref[...].astype(jnp.float32)).astype(out_dtype)
            return

        (xh_ref,) = scratch          # [HP + ts, tl] f32 haloed staging buffer
        s = pl.program_id(1)

        @pl.when(s == 0)
        def _zero_history():         # causal zero history for the first seq tile
            xh_ref[pl.ds(0, HP), :] = jnp.zeros((HP, tl), jnp.float32)

        # stage the current tile behind the halo (aligned, full-width store)
        xh_ref[pl.ds(HP, ts), :] = x_ref[...].astype(jnp.float32)

        # hoist tap weights: one [K, tl] load, pre-broadcast to sub-block height once
        w_all = w_ref[...].astype(jnp.float32)
        w_b = [jnp.broadcast_to(w_all[k:k + 1, :], (SB, tl)) for k in range(K)]

        # vreg-resident accumulation, one aligned store per sub-block
        for r0 in range(0, ts, SB):
            sb = min(SB, ts - r0)
            taps = w_b if sb == SB else [w[:sb] for w in w_b]
            acc = taps[0] * xh_ref[pl.ds(HP + r0, sb), :]
            for k in range(1, K):
                acc = acc + taps[k] * xh_ref[pl.ds(HP + r0 - k, sb), :]
            o_ref[pl.ds(r0, sb), :] = acc.astype(out_dtype)

        if n_seq > 1:
            # this tile's tail becomes the next seq tile's history
            xh_ref[pl.ds(HP - KH, KH), :] = x_ref[pl.ds(ts - KH, KH), :].astype(jnp.float32)

    scratch_shapes = (pltpu.VMEM((HP + ts, tl), jnp.float32),) if KH else ()

    # VMEM budget: double-buffered x + out, double-buffered w, halo scratch, temps.
    est = 4 * (2 * ts * tl * 2 + 2 * K * tl + (HP + ts) * tl + (K + 1) * SB * tl)
    # floor at ~default scoped VMEM, cap well under v7x's 64 MiB physical
    vmem_limit = max(32 << 20, min(est * 3 // 2 + (2 << 20), 48 << 20))

    out = pl.pallas_call(
        conv_kernel,
        out_shape=jax.ShapeDtypeStruct((seq, L), out_dtype),
        grid=grid,
        in_specs=[
            pl.BlockSpec((K, tl), lambda l, s: (0, l)),
            # TODO(synk): on v7x, if xprof shows exposed DMA at lane-tile boundaries,
            # add pipeline_mode=pl.Buffered(3) on this x spec (costs one extra block).
            pl.BlockSpec((ts, tl), lambda l, s: (s, l)),
        ],
        out_specs=pl.BlockSpec((ts, tl), lambda l, s: (s, l)),
        scratch_shapes=scratch_shapes,
        compiler_params=pltpu.CompilerParams(
            dimension_semantics=("parallel", "arbitrary"),
            vmem_limit_bytes=vmem_limit),
        cost_estimate=pl.CostEstimate(
            flops=2 * K * seq * L,
            transcendentals=0,
            bytes_accessed=2 * seq * L * x.dtype.itemsize + K * L * 4),
    )(w2, x2)

    return out.reshape(seq, B, F)


class KernelConv:
    """JAX/Pallas port of torchhydro KernelConv."""

    def __init__(self, a, theta, kernel_size, *, tile_seq=512, tile_lane=2048):
        # a, theta: [batch] routing parameters.
        routa = jnp.tile(a, (kernel_size, 1))[..., None]      # [K, batch, 1]
        routb = jnp.tile(theta, (kernel_size, 1))[..., None]  # [K, batch, 1]
        self.uh = uh_gamma(routa, routb, len_uh=kernel_size)  # [K, batch, 1]
        self.kernel_size = kernel_size
        self.tile_seq = tile_seq
        self.tile_lane = tile_lane

    def __call__(self, x):
        # x: [seq, batch, feature]
        return kernel_conv_forward(
            x, self.uh, tile_seq=self.tile_seq, tile_lane=self.tile_lane)


# ---------------------------------------------------------------------------
# Pure-JAX reference of the same causal conv for a correctness check.
# ---------------------------------------------------------------------------
def ref_forward(x, uh):
    seq, B, F = x.shape
    K = uh.shape[0]
    y = jnp.zeros_like(x)
    for k in range(K):
        y = y.at[k:].add(uh[k, :, 0][None, :, None] * x[: seq - k])
    return y


if __name__ == "__main__":
    key = jax.random.PRNGKey(0)
    k1, k2, k3 = jax.random.split(key, 3)

    # Small shapes: feat=20 makes B*F = 160 (exercises partial lane blocks),
    # seq=48 with tile_seq=16 gives 3 seq tiles (exercises the halo carry).
    seq, batch, feat, kernel_size = 48, 8, 20, 7

    a = jax.random.uniform(k1, (batch,), jnp.float32, minval=0.5, maxval=3.0)
    theta = jax.random.uniform(k2, (batch,), jnp.float32, minval=0.5, maxval=3.0)
    x = jax.random.normal(k3, (seq, batch, feat), dtype=jnp.float32)

    # Config A: small tiles -> multi seq-tile carry + partial trailing lane block.
    mod_a = KernelConv(a, theta, kernel_size, tile_seq=16, tile_lane=128)
    y_a = mod_a(x)
    jax.block_until_ready(y_a)
    y_ref = ref_forward(x, mod_a.uh)
    assert y_a.shape == (seq, batch, feat)
    assert jnp.allclose(y_a, y_ref, atol=1e-5, rtol=1e-5), "config A mismatch vs reference"

    # Config B: default tiles -> single full-dim block per axis, multi sub-block path.
    mod_b = KernelConv(a, theta, kernel_size)
    y_b = mod_b(x)
    jax.block_until_ready(y_b)
    assert jnp.allclose(y_b, y_ref, atol=1e-5, rtol=1e-5), "config B mismatch vs reference"

    # Config C: kernel_size = 1 (pointwise branch, no halo scratch).
    mod_c = KernelConv(a, theta, 1)
    y_c = mod_c(x)
    jax.block_until_ready(y_c)
    assert jnp.allclose(y_c, ref_forward(x, mod_c.uh), atol=1e-5, rtol=1e-5), \
        "config C mismatch vs reference"

    print("KERNEL_OK")
</pallas_src>

<mosaic_0001>
module attributes {stable_mosaic.version = 11 : i64} {
  func.func @conv_kernel(%arg0: i32, %arg1: i32, %arg2: memref<7x128xf32, #tpu.memory_space<vmem>>, %arg3: memref<16x128xf32, #tpu.memory_space<vmem>>, %arg4: memref<16x128xf32, #tpu.memory_space<vmem>>, %arg5: memref<24x128xf32, #tpu.memory_space<vmem>>) attributes {dimension_semantics = [#tpu.dimension_semantics<parallel>, #tpu.dimension_semantics<arbitrary>], iteration_bounds = array<i64: 2, 3>, scalar_prefetch = 0 : i64, scratch_operands = 1 : i64, tpu.core_type = #tpu.core_type<tc>, window_params = [{transform_indices = @transform_0, window_bounds = array<i64: 7, 128>}, {transform_indices = @transform_1, window_bounds = array<i64: 16, 128>}, {transform_indices = @transform_2, window_bounds = array<i64: 16, 128>}]} {
    %c0_i32 = arith.constant 0 : i32
    %0 = arith.cmpi eq, %arg1, %c0_i32 : i32
    %1 = arith.extui %0 : i1 to i32
    %c0_i32_0 = arith.constant 0 : i32
    %2 = arith.cmpi ne, %1, %c0_i32_0 : i32
    scf.if %2 {
      %cst = arith.constant 0.000000e+00 : f32
      %50 = vector.broadcast %cst : f32 to vector<8x128xf32>
      %c0_18 = arith.constant 0 : index
      %c0_19 = arith.constant 0 : index
      %51 = vector.load %arg5[%c0_18, %c0_19] : memref<24x128xf32, #tpu.memory_space<vmem>>, vector<8x128xf32>
      tpu.vector_store %arg5[%c0_18, %c0_19], %50 {strides = array<i32>} : memref<24x128xf32, #tpu.memory_space<vmem>>, vector<8x128xf32>,
    } else {
    }
    %c0 = arith.constant 0 : index
    %c0_1 = arith.constant 0 : index
    %3 = vector.load %arg3[%c0, %c0_1] : memref<16x128xf32, #tpu.memory_space<vmem>>, vector<16x128xf32>
    %c8 = arith.constant 8 : index
    %c0_2 = arith.constant 0 : index
    %4 = vector.load %arg5[%c8, %c0_2] : memref<24x128xf32, #tpu.memory_space<vmem>>, vector<16x128xf32>
    tpu.vector_store %arg5[%c8, %c0_2], %3 {strides = array<i32>} : memref<24x128xf32, #tpu.memory_space<vmem>>, vector<16x128xf32>,
    %c0_3 = arith.constant 0 : index
    %c0_4 = arith.constant 0 : index
    %5 = vector.load %arg2[%c0_3, %c0_4] : memref<7x128xf32, #tpu.memory_space<vmem>>, vector<7x128xf32>
    %6 = vector.extract_strided_slice %5 {offsets = [0, 0], sizes = [1, 128], strides = [1, 1]} : vector<7x128xf32> to vector<1x128xf32>
    %7 = vector.shape_cast %6 : vector<1x128xf32> to vector<1x128xf32>
    %8 = vector.broadcast %7 : vector<1x128xf32> to vector<16x128xf32>
    %9 = vector.extract_strided_slice %5 {offsets = [1, 0], sizes = [1, 128], strides = [1, 1]} : vector<7x128xf32> to vector<1x128xf32>
    %10 = vector.shape_cast %9 : vector<1x128xf32> to vector<1x128xf32>
    %11 = vector.broadcast %10 : vector<1x128xf32> to vector<16x128xf32>
    %12 = vector.extract_strided_slice %5 {offsets = [2, 0], sizes = [1, 128], strides = [1, 1]} : vector<7x128xf32> to vector<1x128xf32>
    %13 = vector.shape_cast %12 : vector<1x128xf32> to vector<1x128xf32>
    %14 = vector.broadcast %13 : vector<1x128xf32> to vector<16x128xf32>
    %15 = vector.extract_strided_slice %5 {offsets = [3, 0], sizes = [1, 128], strides = [1, 1]} : vector<7x128xf32> to vector<1x128xf32>
    %16 = vector.shape_cast %15 : vector<1x128xf32> to vector<1x128xf32>
    %17 = vector.broadcast %16 : vector<1x128xf32> to vector<16x128xf32>
    %18 = vector.extract_strided_slice %5 {offsets = [4, 0], sizes = [1, 128], strides = [1, 1]} : vector<7x128xf32> to vector<1x128xf32>
    %19 = vector.shape_cast %18 : vector<1x128xf32> to vector<1x128xf32>
    %20 = vector.broadcast %19 : vector<1x128xf32> to vector<16x128xf32>
    %21 = vector.extract_strided_slice %5 {offsets = [5, 0], sizes = [1, 128], strides = [1, 1]} : vector<7x128xf32> to vector<1x128xf32>
    %22 = vector.shape_cast %21 : vector<1x128xf32> to vector<1x128xf32>
    %23 = vector.broadcast %22 : vector<1x128xf32> to vector<16x128xf32>
    %24 = vector.extract_strided_slice %5 {offsets = [6, 0], sizes = [1, 128], strides = [1, 1]} : vector<7x128xf32> to vector<1x128xf32>
    %25 = vector.shape_cast %24 : vector<1x128xf32> to vector<1x128xf32>
    %26 = vector.broadcast %25 : vector<1x128xf32> to vector<16x128xf32>
    %c8_5 = arith.constant 8 : index
    %c0_6 = arith.constant 0 : index
    %27 = vector.load %arg5[%c8_5, %c0_6] : memref<24x128xf32, #tpu.memory_space<vmem>>, vector<16x128xf32>
    %28 = arith.mulf %8, %27 : vector<16x128xf32>
    %c7 = arith.constant 7 : index
    %c0_7 = arith.constant 0 : index
    %29 = vector.load %arg5[%c7, %c0_7] : memref<24x128xf32, #tpu.memory_space<vmem>>, vector<16x128xf32>
    %30 = arith.mulf %11, %29 : vector<16x128xf32>
    %31 = arith.addf %28, %30 : vector<16x128xf32>
    %c6 = arith.constant 6 : index
    %c0_8 = arith.constant 0 : index
    %32 = vector.load %arg5[%c6, %c0_8] : memref<24x128xf32, #tpu.memory_space<vmem>>, vector<16x128xf32>
    %33 = arith.mulf %14, %32 : vector<16x128xf32>
    %34 = arith.addf %31, %33 : vector<16x128xf32>
    %c5 = arith.constant 5 : index
    %c0_9 = arith.constant 0 : index
    %35 = vector.load %arg5[%c5, %c0_9] : memref<24x128xf32, #tpu.memory_space<vmem>>, vector<16x128xf32>
    %36 = arith.mulf %17, %35 : vector<16x128xf32>
    %37 = arith.addf %34, %36 : vector<16x128xf32>
    %c4 = arith.constant 4 : index
    %c0_10 = arith.constant 0 : index
    %38 = vector.load %arg5[%c4, %c0_10] : memref<24x128xf32, #tpu.memory_space<vmem>>, vector<16x128xf32>
    %39 = arith.mulf %20, %38 : vector<16x128xf32>
    %40 = arith.addf %37, %39 : vector<16x128xf32>
    %c3 = arith.constant 3 : index
    %c0_11 = arith.constant 0 : index
    %41 = vector.load %arg5[%c3, %c0_11] : memref<24x128xf32, #tpu.memory_space<vmem>>, vector<16x128xf32>
    %42 = arith.mulf %23, %41 : vector<16x128xf32>
    %43 = arith.addf %40, %42 : vector<16x128xf32>
    %c2 = arith.constant 2 : index
    %c0_12 = arith.constant 0 : index
    %44 = vector.load %arg5[%c2, %c0_12] : memref<24x128xf32, #tpu.memory_space<vmem>>, vector<16x128xf32>
    %45 = arith.mulf %26, %44 : vector<16x128xf32>
    %46 = arith.addf %43, %45 : vector<16x128xf32>
    %c0_13 = arith.constant 0 : index
    %c0_14 = arith.constant 0 : index
    %47 = vector.load %arg4[%c0_13, %c0_14] : memref<16x128xf32, #tpu.memory_space<vmem>>, vector<16x128xf32>
    tpu.vector_store %arg4[%c0_13, %c0_14], %46 {strides = array<i32>} : memref<16x128xf32, #tpu.memory_space<vmem>>, vector<16x128xf32>,
    %c10 = arith.constant 10 : index
    %c0_15 = arith.constant 0 : index
    %48 = vector.load %arg3[%c10, %c0_15] : memref<16x128xf32, #tpu.memory_space<vmem>>, vector<6x128xf32>
    %c2_16 = arith.constant 2 : index
    %c0_17 = arith.constant 0 : index
    %49 = vector.load %arg5[%c2_16, %c0_17] : memref<24x128xf32, #tpu.memory_space<vmem>>, vector<6x128xf32>
    tpu.vector_store %arg5[%c2_16, %c0_17], %48 {strides = array<i32>} : memref<24x128xf32, #tpu.memory_space<vmem>>, vector<6x128xf32>,
    return
  }
  func.func @transform_0(%arg0: i32, %arg1: i32) -> (i32, i32) {
    %c0_i32 = arith.constant 0 : i32
    %c0_i32_0 = arith.constant 0 : i32
    return %c0_i32, %arg0 : i32, i32
  }
  func.func @transform_1(%arg0: i32, %arg1: i32) -> (i32, i32) {
    %c0_i32 = arith.constant 0 : i32
    return %arg1, %arg0 : i32, i32
  }
  func.func @transform_2(%arg0: i32, %arg1: i32) -> (i32, i32) {
    %c0_i32 = arith.constant 0 : i32
    return %arg1, %arg0 : i32, i32
  }
}

</mosaic_0001>

<llo_original>
// kernel: tpu_custom_call.1
$region0: #{tpu_custom_call.1}
  #allocation0 [shape = 'u32[]', space=smem, size = 0x4, offset = 0x4, fixed_abs, tag = 'smem constant byte address 0x4 - core index']
  #allocation1 [shape = 'u32[144,128]{1,0:T(1,128)}', space=vmem, size = 0x12000, scoped, tag = 'internal scratch']
  #allocation2 [shape = 'f32[24,128]{1,0:T(8,128)}', space=vmem, size = 0x3000, scoped, tag = 'scratch operand']
  %s0 = inlined_call_operand.hbm [shape: f32[7,160], index: 0, kind: input, shape index: {}]
  %s1 = inlined_call_operand.hbm [shape: f32[48,160], index: 1, kind: input, shape index: {}]
  %s2 = inlined_call_operand.hbm [shape: f32[48,160], index: 2, kind: output, shape index: {}]
  %s3 = sld [smem:[#allocation0]]
  $region53: #{tpu_custom_call.1} parent=0
    _
  %s5 = ssub.s32 1, %s3
  %s6 = scalar_select 0, %s5, %s3
  $region1: #{tpu_custom_call.1} parent=0
    #allocation3 [shape = 'u8[8192]{0}', space=vmem, size = 0x2000, scoped, tag = 'input window, operand 0']
    #allocation4 [shape = 's32[2]{0}', space=sflag, size = 0x8, scoped, tag = 'scoped memory for tpu_custom_call.1']
    #allocation5 [shape = 's32[2]{0}', space=sflag, size = 0x8, scoped, tag = 'scoped memory for tpu_custom_call.1']
    #allocation6 [shape = 'u8[16384]{0}', space=vmem, size = 0x4000, scoped, tag = 'input window, operand 1']
    #allocation7 [shape = 's32[2]{0}', space=sflag, size = 0x8, scoped, tag = 'scoped memory for tpu_custom_call.1']
    #allocation8 [shape = 'u8[16384]{0}', space=vmem, size = 0x4000, scoped, tag = 'output window, operand 0']
    %7 = vsyncpa [#allocation4], 0
    %s8 = scalar_lea.sflag [#allocation4], 1
    %9 = vsyncpa %s8, 0
    %10 = vsyncpa [#allocation7], 0
    %s11 = scalar_lea.sflag [#allocation7], 1
    %12 = vsyncpa %s11, 0
    %13 = vsyncpa [#allocation5], 0
    %s14 = scalar_lea.sflag [#allocation5], 1
    %15 = vsyncpa %s14, 0
    loop: start=0, step=1, limit=8
    $region2: #{tpu_custom_call.1} parent=1 // loop_pre_header
      _
    $region3: #{tpu_custom_call.1} parent=1 // loop_header
      %s17 = sphi 0, %s21
      %p18 = scmp.ge.s32.totalorder %s17, 8
      %s24 = sphi 0, %s36
      %s25 = sphi 0, %s32
      %s26 = sphi 0, %s24
      %s27 = sphi 0, %s25
      %s28 = sphi 0, %s26
      %s29 = sphi 0, %s27
      %s39 = sphi 0, %s41
      %s42 = sphi 0, %s39
      %s43 = sphi 0, %s42
      %s59 = sphi 0, %s43
      %s67 = sphi 0, %s69
      %s70 = sphi 0, %s67
      %s71 = sphi 0, %s70
      %s87 = sphi 0, %s71
      %s95 = sphi 0, %s97
      %s98 = sphi 0, %s95
      %s99 = sphi 0, %s98
      %s115 = sphi 0, %s99
    $region4: #{tpu_custom_call.1} parent=1 // loop_header_branch
      %20 = sbr.rel (%p18) target = $region8
    $region5: #{tpu_custom_call.1} parent=1 // loop_body
      %s22 = ssub.s32 %s17, 1
      %s23 = ssub.s32 %s17, 2
      %s30 = sadd.s32 1, %s25
      %p31 = scmp.ge.s32.totalorder %s30, 3
      %s32 = scalar_select %p31, 0, %s30
      %s33 = sadd.s32 1, %s24
      %s34 = scalar_select %p31, %s33, %s24
      %p35 = scmp.ge.s32.totalorder %s34, 2
      %s36 = scalar_select %p35, 0, %s34
      %s37 = ssub.s32 %s24, %s36
      %p38 = scmp.eq.s32.totalorder %s37, 0
      %s40 = sadd.s32 %s39, 1
      %s41 = scalar_select %p38, %s39, %s40
      %p44 = pneg %p38
      %p45 = scmp.eq.s32.totalorder %s17, 5
      %p46 = por %p44, %p45
      %p47 = scmp.ne.s32.totalorder %s39, %s42
      %p48 = scmp.eq.s32.totalorder %s17, 0
      %p49 = por %p47, %p48
      %p50 = scmp.ne.s32.totalorder %s39, %s42
      %p51 = scmp.eq.s32.totalorder %s22, 5
      %p52 = por %p50, %p51
      %p53 = scmp.ne.s32.totalorder %s42, %s43
      %p54 = scmp.eq.s32.totalorder %s22, 0
      %p55 = por %p53, %p54
      %p56 = scmp.ne.s32.totalorder %s42, %s43
      %p57 = scmp.eq.s32.totalorder %s23, 5
      %p58 = por %p56, %p57
      %p60 = scmp.ne.s32.totalorder %s43, %s59
      %p61 = scmp.eq.s32.totalorder %s23, 0
      %p62 = por %p60, %p61
      %s63 = ssub.s32 %s25, %s32
      %s64 = ssub.s32 %s24, %s36
      %s65 = sor.u32 %s63, %s64
      %p66 = scmp.eq.s32.totalorder %s65, 0
      %s68 = sadd.s32 %s67, 1
      %s69 = scalar_select %p66, %s67, %s68
      %p72 = pneg %p66
      %p73 = scmp.eq.s32.totalorder %s17, 5
      %p74 = por %p72, %p73
      %p75 = scmp.ne.s32.totalorder %s67, %s70
      %p76 = scmp.eq.s32.totalorder %s17, 0
      %p77 = por %p75, %p76
      %p78 = scmp.ne.s32.totalorder %s67, %s70
      %p79 = scmp.eq.s32.totalorder %s22, 5
      %p80 = por %p78, %p79
      %p81 = scmp.ne.s32.totalorder %s70, %s71
      %p82 = scmp.eq.s32.totalorder %s22, 0
      %p83 = por %p81, %p82
      %p84 = scmp.ne.s32.totalorder %s70, %s71
      %p85 = scmp.eq.s32.totalorder %s23, 5
      %p86 = por %p84, %p85
      %p88 = scmp.ne.s32.totalorder %s71, %s87
      %p89 = scmp.eq.s32.totalorder %s23, 0
      %p90 = por %p88, %p89
      %s91 = ssub.s32 %s25, %s32
      %s92 = ssub.s32 %s24, %s36
      %s93 = sor.u32 %s91, %s92
      %p94 = scmp.eq.s32.totalorder %s93, 0
      %s96 = sadd.s32 %s95, 1
      %s97 = scalar_select %p94, %s95, %s96
      %p100 = pneg %p94
      %p101 = scmp.eq.s32.totalorder %s17, 5
      %p102 = por %p100, %p101
      %p103 = scmp.ne.s32.totalorder %s95, %s98
      %p104 = scmp.eq.s32.totalorder %s17, 0
      %p105 = por %p103, %p104
      %p106 = scmp.ne.s32.totalorder %s95, %s98
      %p107 = scmp.eq.s32.totalorder %s22, 5
      %p108 = por %p106, %p107
      %p109 = scmp.ne.s32.totalorder %s98, %s99
      %p110 = scmp.eq.s32.totalorder %s22, 0
      %p111 = por %p109, %p110
      %p112 = scmp.ne.s32.totalorder %s98, %s99
      %p113 = scmp.eq.s32.totalorder %s23, 5
      %p114 = por %p112, %p113
      %p116 = scmp.ne.s32.totalorder %s99, %s115
      %p117 = scmp.eq.s32.totalorder %s23, 0
      %p118 = por %p116, %p117
      %p119 = scmp.le.s32.totalorder 1, %s17
      %p120 = scmp.lt.s32.totalorder %s17, 7
      %p121 = pnand %p119, %p120
      %p122 = pneg %p121
      // Predicated region
      $region9: #{tpu_custom_call.1} parent=5 // pred_check
        _
      $region10: #{tpu_custom_call.1} parent=5 // pred_check_branch
        %124 = sbr.rel (%p121) target = $region12
      $region11: #{tpu_custom_call.1} parent=5 // pred_region
        %s125 = ssub.s32 %s17, 1
      $region12: #{tpu_custom_call.1} parent=5 // pred_fallthru
        _
      %p126 = scmp.lt.s32.totalorder %s17, 6
      // Predicated region
      $region13: #{tpu_custom_call.1} parent=5 // pred_check
        %p127 = pneg %p126
      $region14: #{tpu_custom_call.1} parent=5 // pred_check_branch
        %129 = sbr.rel (%p127) target = $region16
      $region15: #{tpu_custom_call.1} parent=5 // pred_region
        // Predicated region
        $region17: #{tpu_custom_call.1} parent=15 // pred_check
          %p130 = pneg %p49
        $region18: #{tpu_custom_call.1} parent=15 // pred_check_branch
          %132 = sbr.rel (%p130) target = $region20
        $region19: #{tpu_custom_call.1} parent=15 // pred_region
          %s133 = sand.u32 %s39, 1
          %s134 = scalar_lea.sflag [#allocation4], %s133
          %s135 = sand.u32 %s39, 1
          %s136 = smul.addr %s135, 8
          %s137 = scalar_lea.vmem [#allocation3], %s136
          %s139 = ssub.s32 128, 128
          %140 = vsyncadd %s134, %s139
          %s141 = smul.addr %s24, 128
          %s142 = scalar_lea.hbm %s0, %s141
          %s144 = sshll.u32 %s137, 4
          %s145 = int_to_ptr.vmem [resolvable:$true] %s144
          %147 = dma.hbm_to_vmem [thread:$0]  %s142, 128, %s145, %s134
        $region20: #{tpu_custom_call.1} parent=15 // pred_fallthru
          _
        // Predicated region
        $region21: #{tpu_custom_call.1} parent=15 // pred_check
          %p148 = pneg %p77
        $region22: #{tpu_custom_call.1} parent=15 // pred_check_branch
          %150 = sbr.rel (%p148) target = $region24
        $region23: #{tpu_custom_call.1} parent=15 // pred_region
          %s151 = sand.u32 %s67, 1
          %s152 = scalar_lea.sflag [#allocation7], %s151
          %s153 = sand.u32 %s67, 1
          %s154 = smul.addr %s153, 16
          %s155 = scalar_lea.vmem [#allocation6], %s154
          %s156 = smul.u32 2, %s25
          %s158 = ssub.s32 256, 256
          %159 = vsyncadd %s152, %s158
          %s160 = smul.addr %s156, 2
          %s161 = sadd.s32 %s24, %s160
          %s162 = smul.addr %s161, 128
          %s163 = scalar_lea.hbm %s1, %s162
          %s164 = sshll.u32 %s155, 4
          %s165 = int_to_ptr.vmem [resolvable:$true] %s164
          %170 = dma.hbm_to_vmem [thread:$0]  %s163, 256, %s165, %s152, 256, 128, 8
        $region24: #{tpu_custom_call.1} parent=15 // pred_fallthru
          _
      $region16: #{tpu_custom_call.1} parent=5 // pred_fallthru
        _
      %p171 = scmp.le.s32.totalorder 1, %s17
      %p172 = scmp.lt.s32.totalorder %s17, 7
      %p173 = pnand %p171, %p172
      %p174 = pneg %p173
      // Predicated region
      $region25: #{tpu_custom_call.1} parent=5 // pred_check
        _
      $region26: #{tpu_custom_call.1} parent=5 // pred_check_branch
        %176 = sbr.rel (%p173) target = $region28
      $region27: #{tpu_custom_call.1} parent=5 // pred_region
        %s177 = ssub.s32 %s17, 1
        %s178 = sand.u32 %s42, 1
        %s179 = scalar_lea.sflag [#allocation4], %s178
        %s180 = sand.u32 %s42, 1
        %s181 = smul.addr %s180, 8
        %s182 = scalar_lea.vmem [#allocation3], %s181
        // Predicated region
        $region29: #{tpu_custom_call.1} parent=27 // pred_check
          %p183 = pneg %p55
        $region30: #{tpu_custom_call.1} parent=27 // pred_check_branch
          %185 = sbr.rel (%p183) target = $region32
        $region31: #{tpu_custom_call.1} parent=27 // pred_region
          %186 = dma.done %s179, 128
        $region32: #{tpu_custom_call.1} parent=27 // pred_fallthru
          _
        %s187 = sand.u32 %s70, 1
        %s188 = scalar_lea.sflag [#allocation7], %s187
        %s189 = sand.u32 %s70, 1
        %s190 = smul.addr %s189, 16
        %s191 = scalar_lea.vmem [#allocation6], %s190
        // Predicated region
        $region33: #{tpu_custom_call.1} parent=27 // pred_check
          %p192 = pneg %p83
        $region34: #{tpu_custom_call.1} parent=27 // pred_check_branch
          %194 = sbr.rel (%p192) target = $region36
        $region35: #{tpu_custom_call.1} parent=27 // pred_region
          %195 = dma.done %s188, 256
        $region36: #{tpu_custom_call.1} parent=27 // pred_fallthru
          _
        %s196 = sand.u32 %s42, 1
        %s197 = scalar_lea.sflag [#allocation4], %s196
        %s198 = sand.u32 %s42, 1
        %s199 = smul.addr %s198, 8
        %s200 = scalar_lea.vmem [#allocation3], %s199
        %p201 = pneg %p55
        %p202 = pneg %p52
        %s203 = sand.u32 %s70, 1
        %s204 = scalar_lea.sflag [#allocation7], %s203
        %s205 = sand.u32 %s70, 1
        %s206 = smul.addr %s205, 16
        %s207 = scalar_lea.vmem [#allocation6], %s206
        %p208 = pneg %p83
        %p209 = pneg %p80
        %p210 = pneg %p111
        %p211 = pneg %p108
        %s212 = sand.u32 %s98, 1
        %s213 = scalar_lea.sflag [#allocation5], %s212
        %s214 = sand.u32 %s98, 1
        %s215 = smul.addr %s214, 16
        %s216 = scalar_lea.vmem [#allocation8], %s215
        %s217 = smul.u32 2, %s27
        %s218 = smul.u32 2, %s27
        %p219 = scmp.eq.s32.totalorder %s27, 0
        // Predicated region
        $region37: #{tpu_custom_call.1} parent=27 // pred_check
          %p220 = pneg %p219
        $region38: #{tpu_custom_call.1} parent=27 // pred_check_branch
          %222 = sbr.rel (%p220) target = $region40
        $region39: #{tpu_custom_call.1} parent=27 // pred_region
          %223 = vst [vmem:[#allocation2] sm:$0xff] 0.0
        $region40: #{tpu_custom_call.1} parent=27 // pred_fallthru
          _
        %v224 = vld [vmem:[%s191] sm:$0xff]
        %v225 = vld [vmem:[%s191 + $0x8] sm:$0xff]
        %226 = vst [vmem:[#allocation2 + $0x8] sm:$0xff] %v224
        %227 = vst [vmem:[#allocation2 + $0x10] sm:$0xff] %v225
        %v228 = vld [vmem:[%s182] sm:$0x7f]
        %v229 = vlaneseq
        %v230 = vshrl.u32 %v229, 7
        %v231 = vsub.s32 0, %v230
        %v232 = vrot.slane %v228, %v231
        %v233 = vlaneseq
        %v234 = vshrl.u32 %v233, 7
        %v235 = vsub.s32 1, %v234
        %v236 = vrot.slane %v228, %v235
        %v237 = vlaneseq
        %v238 = vshrl.u32 %v237, 7
        %v239 = vsub.s32 2, %v238
        %v240 = vrot.slane %v228, %v239
        %v241 = vlaneseq
        %v242 = vshrl.u32 %v241, 7
        %v243 = vsub.s32 3, %v242
        %v244 = vrot.slane %v228, %v243
        %v245 = vlaneseq
        %v246 = vshrl.u32 %v245, 7
        %v247 = vsub.s32 4, %v246
        %v248 = vrot.slane %v228, %v247
        %v249 = vlaneseq
        %v250 = vshrl.u32 %v249, 7
        %v251 = vsub.s32 5, %v250
        %v252 = vrot.slane %v228, %v251
        %v253 = vlaneseq
        %v254 = vshrl.u32 %v253, 7
        %v255 = vsub.s32 6, %v254
        %v256 = vrot.slane %v228, %v255
        %v257 = vld [vmem:[#allocation2 + $0x8] sm:$0xff]
        %v258 = vld [vmem:[#allocation2 + $0x10] sm:$0xff]
        %v259 = vmul.f32 %v232, %v257
        %v260 = vmul.f32 %v232, %v258
        %v261 = vld [vmem:[#allocation2 + $0x7] sm:$0xff]
        %v262 = vld [vmem:[#allocation2 + $0xf] sm:$0xff]
        %v263 = vmul.f32 %v236, %v261
        %v264 = vmul.f32 %v236, %v262
        %v265 = vadd.f32 %v259, %v263
        %v266 = vadd.f32 %v260, %v264
        %v267 = vld [vmem:[#allocation2 + $0x6] sm:$0xff]
        %v268 = vld [vmem:[#allocation2 + $0xe] sm:$0xff]
        %v269 = vmul.f32 %v240, %v267
        %v270 = vmul.f32 %v240, %v268
        %v271 = vadd.f32 %v265, %v269
        %v272 = vadd.f32 %v266, %v270
        %v273 = vld [vmem:[#allocation2 + $0x5] sm:$0xff]
        %v274 = vld [vmem:[#allocation2 + $0xd] sm:$0xff]
        %v275 = vmul.f32 %v244, %v273
        %v276 = vmul.f32 %v244, %v274
        %v277 = vadd.f32 %v271, %v275
        %v278 = vadd.f32 %v272, %v276
        %v279 = vld [vmem:[#allocation2 + $0x4] sm:$0xff]
        %v280 = vld [vmem:[#allocation2 + $0xc] sm:$0xff]
        %v281 = vmul.f32 %v248, %v279
        %v282 = vmul.f32 %v248, %v280
        %v283 = vadd.f32 %v277, %v281
        %v284 = vadd.f32 %v278, %v282
        %v285 = vld [vmem:[#allocation2 + $0x3] sm:$0xff]
        %v286 = vld [vmem:[#allocation2 + $0xb] sm:$0xff]
        %v287 = vmul.f32 %v252, %v285
        %v288 = vmul.f32 %v252, %v286
        %v289 = vadd.f32 %v283, %v287
        %v290 = vadd.f32 %v284, %v288
        %v291 = vld [vmem:[#allocation2 + $0x2] sm:$0xff]
        %v292 = vld [vmem:[#allocation2 + $0xa] sm:$0xff]
        %v293 = vmul.f32 %v256, %v291
        %v294 = vmul.f32 %v256, %v292
        %v295 = vadd.f32 %v289, %v293
        %v296 = vadd.f32 %v290, %v294
        %297 = vst [vmem:[%s216] sm:$0xff] %v295
        %298 = vst [vmem:[%s216 + $0x8] sm:$0xff] %v296
        %v299 = vld [vmem:[%s191 + $0xa] sm:$0x3f]
        %300 = vst [vmem:[#allocation2 + $0x2] sm:$0x3f] %v299
        %s301 = sand.u32 %s98, 1
        %s302 = scalar_lea.sflag [#allocation5], %s301
        %s303 = sand.u32 %s98, 1
        %s304 = smul.addr %s303, 16
        %s305 = scalar_lea.vmem [#allocation8], %s304
        // Predicated region
        $region41: #{tpu_custom_call.1} parent=27 // pred_check
          %p306 = pneg %p108
        $region42: #{tpu_custom_call.1} parent=27 // pred_check_branch
          %308 = sbr.rel (%p306) target = $region44
        $region43: #{tpu_custom_call.1} parent=27 // pred_region
          %s309 = smul.u32 2, %s27
          %s311 = ssub.s32 256, 256
          %312 = vsyncadd %s302, %s311
          %s313 = smul.addr %s309, 2
          %s314 = sadd.s32 %s26, %s313
          %s315 = smul.addr %s314, 128
          %s316 = scalar_lea.hbm %s2, %s315
          %s317 = sshll.u32 %s305, 4
          %s318 = int_to_ptr.vmem [resolvable:$true] %s317
          %323 = dma.vmem_to_hbm [thread:$0]  %s318, 256, %s316, %s302, 128, 256, 8
        $region44: #{tpu_custom_call.1} parent=27 // pred_fallthru
          _
      $region28: #{tpu_custom_call.1} parent=5 // pred_fallthru
        _
      %p324 = scmp.le.s32.totalorder 2, %s17
      // Predicated region
      $region45: #{tpu_custom_call.1} parent=5 // pred_check
        %p325 = pneg %p324
      $region46: #{tpu_custom_call.1} parent=5 // pred_check_branch
        %327 = sbr.rel (%p325) target = $region48
      $region47: #{tpu_custom_call.1} parent=5 // pred_region
        %s328 = ssub.s32 %s17, 2
        // Predicated region
        $region49: #{tpu_custom_call.1} parent=47 // pred_check
          %p329 = pneg %p114
        $region50: #{tpu_custom_call.1} parent=47 // pred_check_branch
          %331 = sbr.rel (%p329) target = $region52
        $region51: #{tpu_custom_call.1} parent=47 // pred_region
          %s332 = sand.u32 %s99, 1
          %s333 = scalar_lea.sflag [#allocation5], %s332
          %s334 = sand.u32 %s99, 1
          %s335 = smul.addr %s334, 16
          %s336 = scalar_lea.vmem [#allocation8], %s335
          %337 = dma.done %s333, 256
        $region52: #{tpu_custom_call.1} parent=47 // pred_fallthru
          _
      $region48: #{tpu_custom_call.1} parent=5 // pred_fallthru
        _
    $region6: #{tpu_custom_call.1} parent=1 // loop_footer
      %s21 = sadd.s32 1, %s17
    $region7: #{tpu_custom_call.1} parent=1 // loop_footer_branch
      %16 = sbr.rel target = $region3
    $region8: #{tpu_custom_call.1} parent=1 // loop_exit
      _
    %338 = vsyncpa [#allocation4], 1
    %s339 = scalar_lea.sflag [#allocation4], 1
    %340 = vsyncpa %s339, 1
    %341 = vsyncpa [#allocation7], 1
    %s342 = scalar_lea.sflag [#allocation7], 1
    %343 = vsyncpa %s342, 1
    %344 = vsyncpa [#allocation5], 1
    %s345 = scalar_lea.sflag [#allocation5], 1
    %346 = vsyncpa %s345, 1

</llo_original>
